<compile_context>
chip_gen: v5e
topology: v5e:2x2
jax: 0.10.0
libtpu: 0.0.40
codegen_flags: <defaults>
</compile_context>

<pallas_src>
import functools

import jax
import jax.numpy as jnp
from jax.experimental import pallas as pl
from jax.experimental.pallas import tpu as pltpu


H_PAD = 128          # hidden width (100 in the module) padded to one 128-lane tile
TN_TARGET = 4096     # target lane width of one adapter-head tile


def _choose_out_tiling(adapter_out):
    """Pad adapter_out to a lane-dense multiple of 128 and pick a tile width TN
    (multiple of 128, <= TN_TARGET) that divides the padded width exactly."""
    out_pad = pl.cdiv(adapter_out, 128) * 128
    if out_pad <= TN_TARGET:
        return out_pad, out_pad
    out_pad = pl.cdiv(out_pad, TN_TARGET) * TN_TARGET
    return out_pad, TN_TARGET


# ----------------------------- Pallas kernel -------------------------------
def hyper_adapter_kernel(task_id_ref,                    # SMEM (1,) int32 (scalar prefetch)
                         task_row_ref, block_emb_ref,    # (1, Dt), (B, Db) bf16
                         w1t_ref, w1b_ref, b1_ref,       # layer 1 (split W1)
                         w2_ref, b2_ref,                 # layer 2
                         w3_ref, b3_ref,                 # adapter head tile (H, TN), (1, TN)
                         out_ref):                       # (B, TN) f32
    """Fused tile + concat + Linear/ReLU/Linear/ReLU/Linear, N-tiled adapter head."""
    del task_id_ref  # consumed by the block_emb index_map (non-sharing gather)

    # Layer 1:  concat([tile(task), blk]) @ W1 + b1
    #        == task_row @ W1_task (broadcast over rows) + blk @ W1_block + b1
    t1 = jnp.dot(task_row_ref[...], w1t_ref[...],
                 preferred_element_type=jnp.float32) + b1_ref[...]     # (1, H)
    h1 = jnp.dot(block_emb_ref[...], w1b_ref[...],
                 preferred_element_type=jnp.float32) + t1              # (B, H)
    h1 = jnp.maximum(h1, 0.0)

    # Layer 2 (recomputed per N tile: ~B*H*H MACs, negligible vs. the w3 DMA,
    # and it keeps the N grid axis fully parallel / megacore-shardable).
    h2 = jnp.dot(h1.astype(jnp.bfloat16), w2_ref[...],
                 preferred_element_type=jnp.float32) + b2_ref[...]
    h2 = jnp.maximum(h2, 0.0)

    # Adapter head, one (H, TN) tile of w3 per grid step.
    a = jnp.dot(h2.astype(jnp.bfloat16), w3_ref[...],
                preferred_element_type=jnp.float32) + b3_ref[...]      # (B, TN)
    out_ref[...] = a.astype(out_ref.dtype)


def _bytes(x):
    return int(x.size) * jnp.dtype(x.dtype).itemsize


def run_hyper_adapter(task_id_arr, task_row, kp, cfg):
    """N-tiled pallas_call: task_id scalar-prefetched, w3/b3/out tiled over TN."""
    B = cfg.block_nums
    Dt = cfg.task_emb_dims
    Db = cfg.block_emb_dims
    H = H_PAD
    out_pad = kp["adapter_out_pad"]
    TN = kp["tn"]
    n_tiles = out_pad // TN

    if cfg.block_emb_sharing:
        block_emb_spec = pl.BlockSpec((B, Db), lambda j, tid: (0, 0))
    else:
        # Scalar-prefetch-driven gather: block index tid -> rows [tid*B, (tid+1)*B)
        block_emb_spec = pl.BlockSpec((B, Db), lambda j, tid: (tid[0], 0))

    in_specs = [
        pl.BlockSpec((1, Dt), lambda j, tid: (0, 0)),     # task_row
        block_emb_spec,                                    # block_emb
        pl.BlockSpec((Dt, H), lambda j, tid: (0, 0)),      # w1_task
        pl.BlockSpec((Db, H), lambda j, tid: (0, 0)),      # w1_block
        pl.BlockSpec((1, H), lambda j, tid: (0, 0)),       # b1
        pl.BlockSpec((H, H), lambda j, tid: (0, 0)),       # w2
        pl.BlockSpec((1, H), lambda j, tid: (0, 0)),       # b2
        pl.BlockSpec((H, TN), lambda j, tid: (0, j)),      # w3 tile
        pl.BlockSpec((1, TN), lambda j, tid: (0, j)),      # b3 tile
    ]
    out_specs = pl.BlockSpec((B, TN), lambda j, tid: (0, j))

    # VMEM budget: small resident operands + double-buffered w3/b3/out tiles.
    resident = (_bytes(task_row) + _bytes(kp["block_emb"]) + _bytes(kp["w1t"]) +
                _bytes(kp["w1b"]) + _bytes(kp["b1"]) + _bytes(kp["w2"]) +
                _bytes(kp["b2"]))
    per_tile = H * TN * 2 + TN * 4 + B * TN * 4
    vmem_limit = int(min(max(4 * (resident + per_tile) + (4 << 20), 16 << 20),
                         32 << 20))

    flops = 2 * B * (cfg.input_dim * H + H * H + H * out_pad)
    bytes_accessed = (resident + _bytes(kp["w3"]) + _bytes(kp["b3"]) +
                      B * out_pad * 4)

    grid_spec = pltpu.PrefetchScalarGridSpec(
        num_scalar_prefetch=1,
        grid=(n_tiles,),
        in_specs=in_specs,
        out_specs=out_specs,
    )

    return pl.pallas_call(
        hyper_adapter_kernel,
        out_shape=jax.ShapeDtypeStruct((B, out_pad), jnp.float32),
        grid_spec=grid_spec,
        compiler_params=pltpu.CompilerParams(
            dimension_semantics=("parallel",),
            vmem_limit_bytes=vmem_limit),
        cost_estimate=pl.CostEstimate(flops=flops, transcendentals=0,
                                      bytes_accessed=bytes_accessed),
    )(task_id_arr, task_row, kp["block_emb"],
      kp["w1t"], kp["w1b"], kp["b1"], kp["w2"], kp["b2"], kp["w3"], kp["b3"])


# ------------------------- Module config / params --------------------------
class HyperAdapterConfig:
    def __init__(self, task_nums, block_nums, task_emb_dims, block_emb_dims,
                 use_block_emb, block_emb_sharing, in_dims, out_dims,
                 down_sample_dim):
        self.task_nums = task_nums
        self.block_nums = block_nums
        self.task_emb_dims = task_emb_dims
        self.block_emb_dims = block_emb_dims
        self.use_block_emb = use_block_emb
        self.block_emb_sharing = block_emb_sharing
        self.in_dims = in_dims
        self.out_dims = out_dims
        self.down_sample_dim = down_sample_dim
        self.hidden = 100                      # hard-coded in the nn.Module
        self.input_dim = task_emb_dims + (block_emb_dims if use_block_emb else 0)
        if use_block_emb:
            self.adapter_out = 2 * in_dims * down_sample_dim
        else:
            self.adapter_out = 2 * in_dims * down_sample_dim * block_nums


def init_params(cfg: HyperAdapterConfig, key):
    """Deterministic synthetic init with the nn.Module's shapes (hidden=100, f32)."""
    ks = jax.random.split(key, 8)
    p = {}
    p["task_embs"] = 0.1 * jax.random.normal(
        ks[0], (cfg.task_nums, cfg.task_emb_dims), jnp.float32)
    if cfg.use_block_emb:
        n_blk = cfg.block_nums if cfg.block_emb_sharing else cfg.block_nums * cfg.task_nums
        p["block_emb"] = 0.1 * jax.random.normal(
            ks[1], (n_blk, cfg.block_emb_dims), jnp.float32)
    p["w1"] = 0.1 * jax.random.normal(ks[2], (cfg.input_dim, cfg.hidden), jnp.float32)
    p["b1"] = 0.1 * jax.random.normal(ks[3], (1, cfg.hidden), jnp.float32)
    p["w2"] = 0.1 * jax.random.normal(ks[4], (cfg.hidden, cfg.hidden), jnp.float32)
    p["b2"] = 0.1 * jax.random.normal(ks[5], (1, cfg.hidden), jnp.float32)
    p["w3"] = 0.1 * jax.random.normal(ks[6], (cfg.hidden, cfg.adapter_out), jnp.float32)
    p["b3"] = 0.1 * jax.random.normal(ks[7], (1, cfg.adapter_out), jnp.float32)
    return p


def _zero_pad2(a, rows, cols):
    return jnp.zeros((rows, cols), a.dtype).at[:a.shape[0], :a.shape[1]].set(a)


def prepare_kernel_params(p, cfg: HyperAdapterConfig):
    """Pad hidden 100->128 and adapter_out to a TN-divisible multiple of 128 with
    zeros (math unchanged), split W1 into task/block halves, store weights and
    embeddings in bf16; biases stay f32."""
    H = H_PAD
    out_pad, tn = _choose_out_tiling(cfg.adapter_out)
    w1 = _zero_pad2(p["w1"], cfg.input_dim, H)
    return {
        "task_embs": p["task_embs"].astype(jnp.bfloat16),
        "block_emb": p["block_emb"].astype(jnp.bfloat16),
        "w1t": w1[:cfg.task_emb_dims, :].astype(jnp.bfloat16),
        "w1b": w1[cfg.task_emb_dims:, :].astype(jnp.bfloat16),
        "b1": _zero_pad2(p["b1"], 1, H),
        "w2": _zero_pad2(p["w2"], H, H).astype(jnp.bfloat16),
        "b2": _zero_pad2(p["b2"], 1, H),
        # TODO(synk): quantize w3 to int8 (v5e/v6e) or fp8-e4m3 (v7x) with an
        # epilogue scale to halve the dominant, bandwidth-limiting HBM stream.
        "w3": _zero_pad2(p["w3"], H, out_pad).astype(jnp.bfloat16),
        "b3": _zero_pad2(p["b3"], 1, out_pad),
        "adapter_out_pad": out_pad,
        "tn": tn,
    }


# ------------------------------ Forward pass -------------------------------
def hyper_adapter_forward(task_id, kp, cfg: HyperAdapterConfig):
    """Returns the stacked (block_nums, 2, down_sample_dim, in_dims) adapters.
    `list(out)` recovers the module's per-block list return for free."""
    if not cfg.use_block_emb:
        # TODO(synk): use_block_emb=False path (single-row MLP with a
        # block_nums-times-wider head) is not wired into the fused kernel.
        raise NotImplementedError("use_block_emb=False path not implemented")
    tid = jnp.clip(jnp.asarray(task_id, jnp.int32), 0, cfg.task_nums - 1)
    # Only the needed (1, Dt) task-embedding row is handed to the kernel.
    task_row = jax.lax.dynamic_slice_in_dim(kp["task_embs"], tid, 1, axis=0)
    a = run_hyper_adapter(tid.reshape((1,)), task_row, kp, cfg)   # (B, out_pad)
    a = a[:, :cfg.adapter_out]
    # TODO(synk): batch several task_ids / adapter layers into one pallas_call
    # to amortize launch + weight-DMA overhead at these tiny per-call sizes.
    return a.reshape(cfg.block_nums, 2, cfg.down_sample_dim, cfg.in_dims)


# Pure-JAX reference (uses the same padded / bf16-rounded weights).
def reference_forward(task_id, kp, cfg: HyperAdapterConfig):
    te = kp["task_embs"][task_id]                              # (Dt,) bf16
    if cfg.block_emb_sharing:
        be = kp["block_emb"]
    else:
        be = jax.lax.dynamic_slice_in_dim(
            kp["block_emb"], task_id * cfg.block_nums, cfg.block_nums, axis=0)
    x = jnp.concatenate([jnp.tile(te[None, :], (cfg.block_nums, 1)), be], axis=-1)
    w1 = jnp.concatenate([kp["w1t"], kp["w1b"]], axis=0)       # (input_dim, H) bf16
    h = jnp.maximum(jnp.dot(x, w1, preferred_element_type=jnp.float32)
                    + kp["b1"], 0.0)
    h = jnp.maximum(jnp.dot(h.astype(jnp.bfloat16), kp["w2"],
                            preferred_element_type=jnp.float32) + kp["b2"], 0.0)
    a = jnp.dot(h.astype(jnp.bfloat16), kp["w3"],
                preferred_element_type=jnp.float32) + kp["b3"]
    a = a[:, :cfg.adapter_out]
    return a.reshape(cfg.block_nums, 2, cfg.down_sample_dim, cfg.in_dims)


def _check(cfg, seed, task_id):
    raw = init_params(cfg, jax.random.PRNGKey(seed))
    kp = prepare_kernel_params(raw, cfg)
    fwd = jax.jit(lambda t: hyper_adapter_forward(t, kp, cfg))
    out = jax.block_until_ready(fwd(jnp.int32(task_id)))
    assert out.shape == (cfg.block_nums, 2, cfg.down_sample_dim, cfg.in_dims), out.shape
    ref = reference_forward(jnp.int32(task_id), kp, cfg)
    max_err = float(jnp.max(jnp.abs(out - ref)))
    # Tolerance covers bf16 quantization plus the (exact-math-equivalent)
    # split-vs-concat accumulation-order difference in layer 1.
    assert jnp.allclose(out, ref, atol=2e-3, rtol=2e-3), f"max_err={max_err}"
    return out


if __name__ == "__main__":
    # Shared block embeddings (the default branch).
    cfg_shared = HyperAdapterConfig(
        task_nums=3, block_nums=8, task_emb_dims=16, block_emb_dims=16,
        use_block_emb=True, block_emb_sharing=True,
        in_dims=32, out_dims=32, down_sample_dim=8)
    _check(cfg_shared, seed=0, task_id=1)

    # Per-task block embeddings: exercises the scalar-prefetch index_map gather.
    cfg_per_task = HyperAdapterConfig(
        task_nums=3, block_nums=8, task_emb_dims=16, block_emb_dims=16,
        use_block_emb=True, block_emb_sharing=False,
        in_dims=32, out_dims=32, down_sample_dim=8)
    _check(cfg_per_task, seed=1, task_id=2)

    print("KERNEL_OK")
</pallas_src>

<mosaic_0001>
module attributes {stable_mosaic.version = 11 : i64} {
  func.func @hyper_adapter_kernel(%arg0: i32, %arg1: memref<1xi32, #tpu.memory_space<smem>>, %arg2: memref<1x16xbf16, #tpu.memory_space<vmem>>, %arg3: memref<8x16xbf16, #tpu.memory_space<vmem>>, %arg4: memref<16x128xbf16, #tpu.memory_space<vmem>>, %arg5: memref<16x128xbf16, #tpu.memory_space<vmem>>, %arg6: memref<1x128xf32, #tpu.memory_space<vmem>>, %arg7: memref<128x128xbf16, #tpu.memory_space<vmem>>, %arg8: memref<1x128xf32, #tpu.memory_space<vmem>>, %arg9: memref<128x512xbf16, #tpu.memory_space<vmem>>, %arg10: memref<1x512xf32, #tpu.memory_space<vmem>>, %arg11: memref<8x512xf32, #tpu.memory_space<vmem>>) attributes {dimension_semantics = [#tpu.dimension_semantics<parallel>], iteration_bounds = array<i64: 1>, scalar_prefetch = 1 : i64, scratch_operands = 0 : i64, tpu.core_type = #tpu.core_type<tc>, window_params = [{pipeline_mode = #tpu.pipeline_mode<synchronous>, transform_indices = @transform_0, window_bounds = array<i64: 1, 16>}, {pipeline_mode = #tpu.pipeline_mode<synchronous>, transform_indices = @transform_1, window_bounds = array<i64: 8, 16>}, {pipeline_mode = #tpu.pipeline_mode<synchronous>, transform_indices = @transform_2, window_bounds = array<i64: 16, 128>}, {pipeline_mode = #tpu.pipeline_mode<synchronous>, transform_indices = @transform_3, window_bounds = array<i64: 16, 128>}, {pipeline_mode = #tpu.pipeline_mode<synchronous>, transform_indices = @transform_4, window_bounds = array<i64: 1, 128>}, {pipeline_mode = #tpu.pipeline_mode<synchronous>, transform_indices = @transform_5, window_bounds = array<i64: 128, 128>}, {pipeline_mode = #tpu.pipeline_mode<synchronous>, transform_indices = @transform_6, window_bounds = array<i64: 1, 128>}, {transform_indices = @transform_7, window_bounds = array<i64: 128, 512>}, {transform_indices = @transform_8, window_bounds = array<i64: 1, 512>}, {transform_indices = @transform_9, window_bounds = array<i64: 8, 512>}]} {
    %c0 = arith.constant 0 : index
    %c0_0 = arith.constant 0 : index
    %0 = vector.load %arg2[%c0, %c0_0] : memref<1x16xbf16, #tpu.memory_space<vmem>>, vector<1x16xbf16>
    %c0_1 = arith.constant 0 : index
    %c0_2 = arith.constant 0 : index
    %1 = vector.load %arg4[%c0_1, %c0_2] : memref<16x128xbf16, #tpu.memory_space<vmem>>, vector<16x128xbf16>
    %cst = arith.constant dense<0.000000e+00> : vector<1x128xf32>
    %2 = tpu.matmul %0, %1, %cst {dimension_numbers = #tpu.dot_dimension_numbers<[1], [0], [0], [1], [0, 0, 1, 1], [], []>} : vector<1x16xbf16>, vector<16x128xbf16>, vector<1x128xf32> -> vector<1x128xf32>
    %c0_3 = arith.constant 0 : index
    %c0_4 = arith.constant 0 : index
    %3 = vector.load %arg6[%c0_3, %c0_4] : memref<1x128xf32, #tpu.memory_space<vmem>>, vector<1x128xf32>
    %4 = arith.addf %2, %3 : vector<1x128xf32>
    %c0_5 = arith.constant 0 : index
    %c0_6 = arith.constant 0 : index
    %5 = vector.load %arg3[%c0_5, %c0_6] : memref<8x16xbf16, #tpu.memory_space<vmem>>, vector<8x16xbf16>
    %c0_7 = arith.constant 0 : index
    %c0_8 = arith.constant 0 : index
    %6 = vector.load %arg5[%c0_7, %c0_8] : memref<16x128xbf16, #tpu.memory_space<vmem>>, vector<16x128xbf16>
    %cst_9 = arith.constant dense<0.000000e+00> : vector<8x128xf32>
    %7 = tpu.matmul %5, %6, %cst_9 {dimension_numbers = #tpu.dot_dimension_numbers<[1], [0], [0], [1], [0, 0, 1, 1], [], []>} : vector<8x16xbf16>, vector<16x128xbf16>, vector<8x128xf32> -> vector<8x128xf32>
    %8 = vector.broadcast %4 : vector<1x128xf32> to vector<8x128xf32>
    %9 = arith.addf %7, %8 : vector<8x128xf32>
    %cst_10 = arith.constant 0.000000e+00 : f32
    %10 = vector.broadcast %cst_10 : f32 to vector<8x128xf32>
    %11 = arith.maximumf %9, %10 : vector<8x128xf32>
    %12 = arith.truncf %11 : vector<8x128xf32> to vector<8x128xbf16>
    %c0_11 = arith.constant 0 : index
    %c0_12 = arith.constant 0 : index
    %13 = vector.load %arg7[%c0_11, %c0_12] : memref<128x128xbf16, #tpu.memory_space<vmem>>, vector<128x128xbf16>
    %cst_13 = arith.constant dense<0.000000e+00> : vector<8x128xf32>
    %14 = tpu.matmul %12, %13, %cst_13 {dimension_numbers = #tpu.dot_dimension_numbers<[1], [0], [0], [1], [0, 0, 1, 1], [], []>} : vector<8x128xbf16>, vector<128x128xbf16>, vector<8x128xf32> -> vector<8x128xf32>
    %c0_14 = arith.constant 0 : index
    %c0_15 = arith.constant 0 : index
    %15 = vector.load %arg8[%c0_14, %c0_15] : memref<1x128xf32, #tpu.memory_space<vmem>>, vector<1x128xf32>
    %16 = vector.broadcast %15 : vector<1x128xf32> to vector<8x128xf32>
    %17 = arith.addf %14, %16 : vector<8x128xf32>
    %cst_16 = arith.constant 0.000000e+00 : f32
    %18 = vector.broadcast %cst_16 : f32 to vector<8x128xf32>
    %19 = arith.maximumf %17, %18 : vector<8x128xf32>
    %20 = arith.truncf %19 : vector<8x128xf32> to vector<8x128xbf16>
    %c0_17 = arith.constant 0 : index
    %c0_18 = arith.constant 0 : index
    %21 = vector.load %arg9[%c0_17, %c0_18] : memref<128x512xbf16, #tpu.memory_space<vmem>>, vector<128x512xbf16>
    %cst_19 = arith.constant dense<0.000000e+00> : vector<8x512xf32>
    %22 = tpu.matmul %20, %21, %cst_19 {dimension_numbers = #tpu.dot_dimension_numbers<[1], [0], [0], [1], [0, 0, 1, 1], [], []>} : vector<8x128xbf16>, vector<128x512xbf16>, vector<8x512xf32> -> vector<8x512xf32>
    %c0_20 = arith.constant 0 : index
    %c0_21 = arith.constant 0 : index
    %23 = vector.load %arg10[%c0_20, %c0_21] : memref<1x512xf32, #tpu.memory_space<vmem>>, vector<1x512xf32>
    %24 = vector.broadcast %23 : vector<1x512xf32> to vector<8x512xf32>
    %25 = arith.addf %22, %24 : vector<8x512xf32>
    %c0_22 = arith.constant 0 : index
    %c0_23 = arith.constant 0 : index
    %26 = vector.load %arg11[%c0_22, %c0_23] : memref<8x512xf32, #tpu.memory_space<vmem>>, vector<8x512xf32>
    tpu.vector_store %arg11[%c0_22, %c0_23], %25 {strides = array<i32>} : memref<8x512xf32, #tpu.memory_space<vmem>>, vector<8x512xf32>,
    return
  }
  func.func @transform_0(%arg0: i32, %arg1: memref<1xi32, #tpu.memory_space<smem>>) -> (i32, i32) {
    %c0_i32 = arith.constant 0 : i32
    %c0_i32_0 = arith.constant 0 : i32
    %c0_i32_1 = arith.constant 0 : i32
    return %c0_i32, %c0_i32_0 : i32, i32
  }
  func.func @transform_1(%arg0: i32, %arg1: memref<1xi32, #tpu.memory_space<smem>>) -> (i32, i32) {
    %c0_i32 = arith.constant 0 : i32
    %c0_i32_0 = arith.constant 0 : i32
    %c0_i32_1 = arith.constant 0 : i32
    return %c0_i32, %c0_i32_0 : i32, i32
  }
  func.func @transform_2(%arg0: i32, %arg1: memref<1xi32, #tpu.memory_space<smem>>) -> (i32, i32) {
    %c0_i32 = arith.constant 0 : i32
    %c0_i32_0 = arith.constant 0 : i32
    %c0_i32_1 = arith.constant 0 : i32
    return %c0_i32, %c0_i32_0 : i32, i32
  }
  func.func @transform_3(%arg0: i32, %arg1: memref<1xi32, #tpu.memory_space<smem>>) -> (i32, i32) {
    %c0_i32 = arith.constant 0 : i32
    %c0_i32_0 = arith.constant 0 : i32
    %c0_i32_1 = arith.constant 0 : i32
    return %c0_i32, %c0_i32_0 : i32, i32
  }
  func.func @transform_4(%arg0: i32, %arg1: memref<1xi32, #tpu.memory_space<smem>>) -> (i32, i32) {
    %c0_i32 = arith.constant 0 : i32
    %c0_i32_0 = arith.constant 0 : i32
    %c0_i32_1 = arith.constant 0 : i32
    return %c0_i32, %c0_i32_0 : i32, i32
  }
  func.func @transform_5(%arg0: i32, %arg1: memref<1xi32, #tpu.memory_space<smem>>) -> (i32, i32) {
    %c0_i32 = arith.constant 0 : i32
    %c0_i32_0 = arith.constant 0 : i32
    %c0_i32_1 = arith.constant 0 : i32
    return %c0_i32, %c0_i32_0 : i32, i32
  }
  func.func @transform_6(%arg0: i32, %arg1: memref<1xi32, #tpu.memory_space<smem>>) -> (i32, i32) {
    %c0_i32 = arith.constant 0 : i32
    %c0_i32_0 = arith.constant 0 : i32
    %c0_i32_1 = arith.constant 0 : i32
    return %c0_i32, %c0_i32_0 : i32, i32
  }
  func.func @transform_7(%arg0: i32, %arg1: memref<1xi32, #tpu.memory_space<smem>>) -> (i32, i32) {
    %c0_i32 = arith.constant 0 : i32
    %c0_i32_0 = arith.constant 0 : i32
    return %c0_i32, %arg0 : i32, i32
  }
  func.func @transform_8(%arg0: i32, %arg1: memref<1xi32, #tpu.memory_space<smem>>) -> (i32, i32) {
    %c0_i32 = arith.constant 0 : i32
    %c0_i32_0 = arith.constant 0 : i32
    return %c0_i32, %arg0 : i32, i32
  }
  func.func @transform_9(%arg0: i32, %arg1: memref<1xi32, #tpu.memory_space<smem>>) -> (i32, i32) {
    %c0_i32 = arith.constant 0 : i32
    %c0_i32_0 = arith.constant 0 : i32
    return %c0_i32, %arg0 : i32, i32
  }
}

</mosaic_0001>

<llo_original>
// kernel: _lambda_.1
$region0: #{_lambda_.1}
  #allocation0 [shape = 'u32[]', space=smem, size = 0x4, offset = 0x4, fixed_abs, tag = 'smem constant byte address 0x4 - core index']
  #allocation1 [shape = 'u32[72,128]{1,0:T(1,128)}', space=vmem, size = 0x9000, scoped, tag = 'internal scratch']
  #allocation2 [shape = 's32[1]{0}', space=sflag, size = 0x4, scoped, tag = 'scoped memory for _lambda_.1']
  #allocation3 [shape = 's32[1]{0:T(128)S(6)}', space=smem, size = 0x200, scoped, tag = 'prefetched SMEM operand 0']
  %s0 = inlined_call_operand.<no memory space> [shape: s32[1], index: 0, kind: input, shape index: {}]
  %s1 = inlined_call_operand.vmem [shape: bf16[1,16], index: 1, kind: input, shape index: {}]
  %s2 = inlined_call_operand.hbm [shape: bf16[8,16], index: 2, kind: input, shape index: {}]
  %s3 = inlined_call_operand.hbm [shape: bf16[16,128], index: 3, kind: input, shape index: {}]
  %s4 = inlined_call_operand.vmem [shape: bf16[16,128], index: 4, kind: input, shape index: {}]
  %s5 = inlined_call_operand.vmem [shape: f32[1,128], index: 5, kind: input, shape index: {}]
  %s6 = inlined_call_operand.hbm [shape: bf16[128,128], index: 6, kind: input, shape index: {}]
  %s7 = inlined_call_operand.vmem [shape: f32[1,128], index: 7, kind: input, shape index: {}]
  %s8 = inlined_call_operand.hbm [shape: bf16[128,512], index: 8, kind: input, shape index: {}]
  %s9 = inlined_call_operand.vmem [shape: f32[1,512], index: 9, kind: input, shape index: {}]
  %s10 = inlined_call_operand.vmem [shape: f32[8,512], index: 10, kind: output, shape index: {}]
  %s11 = sld [smem:[#allocation0]]
  $region62: #{_lambda_.1} parent=0
    _
  %s13 = ssub.s32 1, %s11
  %s14 = scalar_select 0, %s13, %s11
  %15 = sst [smem:[#allocation3]] %s0
  $region1: #{_lambda_.1} parent=0
    #allocation4 [shape = 'u8[2048]{0}', space=vmem, size = 0x800, scoped, tag = 'input window, operand 2, single buffered']
    #allocation5 [shape = 's32[1]{0}', space=sflag, size = 0x4, scoped, tag = 'scoped memory for _lambda_.1']
    #allocation6 [shape = 'u8[4096]{0}', space=vmem, size = 0x1000, scoped, tag = 'input window, operand 3, single buffered']
    #allocation7 [shape = 's32[1]{0}', space=sflag, size = 0x4, scoped, tag = 'scoped memory for _lambda_.1']
    #allocation8 [shape = 'u8[32768]{0}', space=vmem, size = 0x8000, scoped, tag = 'input window, operand 6, single buffered']
    #allocation9 [shape = 'u8[131072]{0}', space=vmem, size = 0x20000, scoped, tag = 'input window, operand 8, single buffered']
    #allocation10 [shape = 's32[1]{0}', space=sflag, size = 0x4, scoped, tag = 'scoped memory for _lambda_.1']
    %16 = vsyncpa [#allocation5], 0
    %17 = vsyncpa [#allocation7], 0
    %18 = vsyncpa [#allocation10], 0
    // Predicated region
    $region2: #{_lambda_.1} parent=1 // pred_check
      _
    $region3: #{_lambda_.1} parent=1 // pred_check_branch
      %20 = sbr.rel (0) target = $region5
    $region4: #{_lambda_.1} parent=1 // pred_region
      _
    $region5: #{_lambda_.1} parent=1 // pred_fallthru
      _
    // Predicated region
    $region6: #{_lambda_.1} parent=1 // pred_check
      _
    $region7: #{_lambda_.1} parent=1 // pred_check_branch
      %22 = sbr.rel (0) target = $region9
    $region8: #{_lambda_.1} parent=1 // pred_region
      %24 = vsyncadd [#allocation5], 0
      %s26 = sshll.u32 %s2, 4
      %s27 = int_to_ptr.hbm [resolvable:$true] %s26
      %s28 = sshll.u32 [#allocation4], 4
      %s29 = int_to_ptr.vmem [resolvable:$true] %s28
      %31 = dma.hbm_to_vmem [thread:$0]  %s27, 64, %s29, [#allocation5]
    $region9: #{_lambda_.1} parent=1 // pred_fallthru
      _
    // Predicated region
    $region10: #{_lambda_.1} parent=1 // pred_check
      _
    $region11: #{_lambda_.1} parent=1 // pred_check_branch
      %33 = sbr.rel (0) target = $region13
    $region12: #{_lambda_.1} parent=1 // pred_region
      %35 = vsyncadd [#allocation7], 0
      %s36 = sshll.u32 %s3, 4
      %s37 = int_to_ptr.hbm [resolvable:$true] %s36
      %s38 = sshll.u32 [#allocation6], 4
      %s39 = int_to_ptr.vmem [resolvable:$true] %s38
      %44 = dma.hbm_to_vmem [thread:$0]  %s37, 128, %s39, [#allocation7], 64, 64, 4
    $region13: #{_lambda_.1} parent=1 // pred_fallthru
      _
    // Predicated region
    $region14: #{_lambda_.1} parent=1 // pred_check
      _
    $region15: #{_lambda_.1} parent=1 // pred_check_branch
      %46 = sbr.rel (0) target = $region17
    $region16: #{_lambda_.1} parent=1 // pred_region
      _
    $region17: #{_lambda_.1} parent=1 // pred_fallthru
      _
    // Predicated region
    $region18: #{_lambda_.1} parent=1 // pred_check
      _
    $region19: #{_lambda_.1} parent=1 // pred_check_branch
      %48 = sbr.rel (0) target = $region21
    $region20: #{_lambda_.1} parent=1 // pred_region
      _
    $region21: #{_lambda_.1} parent=1 // pred_fallthru
      _
    // Predicated region
    $region22: #{_lambda_.1} parent=1 // pred_check
      _
    $region23: #{_lambda_.1} parent=1 // pred_check_branch
      %50 = sbr.rel (0) target = $region25
    $region24: #{_lambda_.1} parent=1 // pred_region
      %52 = vsyncadd [#allocation7], 0
      %s53 = sshll.u32 %s6, 4
      %s54 = int_to_ptr.hbm [resolvable:$true] %s53
      %s55 = sshll.u32 [#allocation8], 4
      %s56 = int_to_ptr.vmem [resolvable:$true] %s55
      %61 = dma.hbm_to_vmem [thread:$0]  %s54, 1024, %s56, [#allocation7], 64, 64, 4
    $region25: #{_lambda_.1} parent=1 // pred_fallthru
      _
    // Predicated region
    $region26: #{_lambda_.1} parent=1 // pred_check
      _
    $region27: #{_lambda_.1} parent=1 // pred_check_branch
      %63 = sbr.rel (0) target = $region29
    $region28: #{_lambda_.1} parent=1 // pred_region
      _
    $region29: #{_lambda_.1} parent=1 // pred_fallthru
      _
    // Predicated region
    $region30: #{_lambda_.1} parent=1 // pred_check
      _
    $region31: #{_lambda_.1} parent=1 // pred_check_branch
      %65 = sbr.rel (0) target = $region33
    $region32: #{_lambda_.1} parent=1 // pred_region
      %67 = vsyncadd [#allocation10], 0
      %s68 = sshll.u32 %s8, 4
      %s69 = int_to_ptr.hbm [resolvable:$true] %s68
      %s70 = sshll.u32 [#allocation9], 4
      %s71 = int_to_ptr.vmem [resolvable:$true] %s70
      %76 = dma.hbm_to_vmem [thread:$0]  %s69, 4096, %s71, [#allocation10], 256, 256, 16
    $region33: #{_lambda_.1} parent=1 // pred_fallthru
      _
    // Predicated region
    $region34: #{_lambda_.1} parent=1 // pred_check
      _
    $region35: #{_lambda_.1} parent=1 // pred_check_branch
      %78 = sbr.rel (0) target = $region37
    $region36: #{_lambda_.1} parent=1 // pred_region
      _
    $region37: #{_lambda_.1} parent=1 // pred_fallthru
      _
    // Predicated region
    $region38: #{_lambda_.1} parent=1 // pred_check
      _
    $region39: #{_lambda_.1} parent=1 // pred_check_branch
      %80 = sbr.rel (0) target = $region41
    $region40: #{_lambda_.1} parent=1 // pred_region
      %82 = dma.done [#allocation5], 64
    $region41: #{_lambda_.1} parent=1 // pred_fallthru
      _
    // Predicated region
    $region42: #{_lambda_.1} parent=1 // pred_check
      _
    $region43: #{_lambda_.1} parent=1 // pred_check_branch
      %84 = sbr.rel (0) target = $region45
    $region44: #{_lambda_.1} parent=1 // pred_region
      %86 = dma.done [#allocation7], 128
    $region45: #{_lambda_.1} parent=1 // pred_fallthru
      _
    // Predicated region
    $region46: #{_lambda_.1} parent=1 // pred_check
      _
    $region47: #{_lambda_.1} parent=1 // pred_check_branch
      %88 = sbr.rel (0) target = $region49
    $region48: #{_lambda_.1} parent=1 // pred_region
      %90 = dma.done [#allocation7], 1024
    $region49: #{_lambda_.1} parent=1 // pred_fallthru
      _
    // Predicated region
    $region50: #{_lambda_.1} parent=1 // pred_check
      _
    $region51: #{_lambda_.1} parent=1 // pred_check_branch
      %92 = sbr.rel (0) target = $region53
    $region52: #{_lambda_.1} parent=1 // pred_region
      %94 = dma.done [#allocation10], 4096
    $region53: #{_lambda_.1} parent=1 // pred_fallthru
      _
    %v96 = vld [vmem:[%s1] sm:$0x1]
    %v97 = vld [vmem:[#allocation6] sm:$0xf]
    %v98 = vld [vmem:[#allocation6 + $0x4] sm:$0xf]
    %v99 = vld [vmem:[%s5] sm:$0x1]
    %v102 = vunpack.c.l.b16 %v97
    %v103 = vunpack.c.l.b16 %v98
    %v104 = vpack.c.b16 %v103, %v102
    %vm106 = vcmask 130048
    %v108 = vsel %vm106, %v96, 0
    %110 = vmatpush.bf16.msra.mxu0 0
    %111 = vmatpush.bf16.msra.mxu0 0
    %112 = vmatpush.bf16.msra.mxu0 0
    %113 = vmatpush.bf16.msra.mxu0 0
    %114 = vmatpush.bf16.msra.mxu0 0
    %115 = vmatpush.bf16.msra.mxu0 0
    %116 = vmatpush.bf16.msra.mxu0 0
    %117 = vmatpush.bf16.msra.mxu0 %v104
    %118 = vmatmul.bf16.gmra.mxu0 %v108
    %v119 = vpop.f32.mrf.mxu0
    %v120 = vadd.f32 %v99, %v119
    %v121 = vpop.f32.mrf.mxu0
    %122 = vdwg.mxu0
    %v123 = vld [vmem:[#allocation4] sm:$0xf]
    %v124 = vld [vmem:[%s4] sm:$0xf]
    %v125 = vld [vmem:[%s4 + $0x4] sm:$0xf]
    %v126 = vperm.slane %v120, 0
    %v129 = vunpack.c.l.b16 %v124
    %v130 = vunpack.c.l.b16 %v125
    %v131 = vpack.c.b16 %v130, %v129
    %v134 = vsel %vm106, %v123, 0
    %136 = vmatpush.bf16.msra.mxu0 0
    %137 = vmatpush.bf16.msra.mxu0 0
    %138 = vmatpush.bf16.msra.mxu0 0
    %139 = vmatpush.bf16.msra.mxu0 0
    %140 = vmatpush.bf16.msra.mxu0 0
    %141 = vmatpush.bf16.msra.mxu0 0
    %142 = vmatpush.bf16.msra.mxu0 0
    %143 = vmatpush.bf16.msra.mxu0 %v131
    %144 = vmatmul.bf16.gmra.mxu0 %v134
    %v145 = vpop.f32.mrf.mxu0
    %v146 = vadd.f32 %v126, %v145
    %v147 = vpop.f32.mrf.mxu0
    %148 = vdwg.mxu0
    %v149 = vmax.f32 %v146, 0.0
    %v150 = vpack.c.bf16 %v149, %v149
    %v151 = vld [vmem:[#allocation8] sm:$0xf]
    %v152 = vld [vmem:[#allocation8 + $0x4] sm:$0xf]
    %v153 = vld [vmem:[#allocation8 + $0x8] sm:$0xf]
    %v154 = vld [vmem:[#allocation8 + $0xc] sm:$0xf]
    %v155 = vld [vmem:[#allocation8 + $0x10] sm:$0xf]
    %v156 = vld [vmem:[#allocation8 + $0x14] sm:$0xf]
    %v157 = vld [vmem:[#allocation8 + $0x18] sm:$0xf]
    %v158 = vld [vmem:[#allocation8 + $0x1c] sm:$0xf]
    %v159 = vld [vmem:[#allocation8 + $0x20] sm:$0xf]
    %v160 = vld [vmem:[#allocation8 + $0x24] sm:$0xf]
    %v161 = vld [vmem:[#allocation8 + $0x28] sm:$0xf]
    %v162 = vld [vmem:[#allocation8 + $0x2c] sm:$0xf]
    %v163 = vld [vmem:[#allocation8 + $0x30] sm:$0xf]
    %v164 = vld [vmem:[#allocation8 + $0x34] sm:$0xf]
    %v165 = vld [vmem:[#allocation8 + $0x38] sm:$0xf]
    %v166 = vld [vmem:[#allocation8 + $0x3c] sm:$0xf]
    %v167 = vld [vmem:[%s7] sm:$0x1]
    %v169 = vperm.slane %v167, 0
    %v187 = vunpack.c.l.b16 %v151
    %v188 = vunpack.c.l.b16 %v152
    %v189 = vunpack.c.l.b16 %v153
    %v190 = vunpack.c.l.b16 %v154
    %v191 = vunpack.c.l.b16 %v155
    %v192 = vunpack.c.l.b16 %v156
    %v193 = vunpack.c.l.b16 %v157
    %v194 = vunpack.c.l.b16 %v158
    %v195 = vunpack.c.l.b16 %v159
    %v196 = vunpack.c.l.b16 %v160
    %v197 = vunpack.c.l.b16 %v161
    %v198 = vunpack.c.l.b16 %v162
    %v199 = vunpack.c.l.b16 %v163
    %v200 = vunpack.c.l.b16 %v164
    %v201 = vunpack.c.l.b16 %v165
    %v202 = vunpack.c.l.b16 %v166
    %v203 = vpack.c.b16 %v188, %v187
    %v204 = vpack.c.b16 %v190, %v189
    %v205 = vpack.c.b16 %v192, %v191
    %v206 = vpack.c.b16 %v194, %v193
    %v207 = vpack.c.b16 %v196, %v195
    %v208 = vpack.c.b16 %v198, %v197
    %v209 = vpack.c.b16 %v200, %v199
    %v210 = vpack.c.b16 %v202, %v201
    %219 = vmatpush.bf16.msra.mxu0 %v210
    %220 = vmatpush.bf16.msra.mxu0 %v209
    %221 = vmatpush.bf16.msra.mxu0 %v208
    %222 = vmatpush.bf16.msra.mxu0 %v207
    %223 = vmatpush.bf16.msra.mxu0 %v206
    %224 = vmatpush.bf16.msra.mxu0 %v205
    %225 = vmatpush.bf16.msra.mxu0 %v204
    %226 = vmatpush.bf16.msra.mxu0 %v203
    %227 = vmatmul.bf16.gmra.mxu0 %v150
    %v228 = vpop.f32.mrf.mxu0
    %v229 = vadd.f32 %v169, %v228
    %v230 = vpop.f32.mrf.mxu0
    %231 = vdwg.mxu0
    %v232 = vmax.f32 %v229, 0.0
    %v233 = vpack.c.bf16 %v232, %v232
    %v234 = vld [vmem:[#allocation9] sm:$0xff]
    %v235 = vld [vmem:[#allocation9 + $0x8] sm:$0xff]
    %v236 = vld [vmem:[#allocation9 + $0x10] sm:$0xff]
    %v237 = vld [vmem:[#allocation9 + $0x18] sm:$0xff]
    %v238 = vld [vmem:[#allocation9 + $0x20] sm:$0xff]
    %v239 = vld [vmem:[#allocation9 + $0x28] sm:$0xff]
    %v240 = vld [vmem:[#allocation9 + $0x30] sm:$0xff]
    %v241 = vld [vmem:[#allocation9 + $0x38] sm:$0xff]
    %v242 = vld [vmem:[#allocation9 + $0x40] sm:$0xff]
    %v243 = vld [vmem:[#allocation9 + $0x48] sm:$0xff]
    %v244 = vld [vmem:[#allocation9 + $0x50] sm:$0xff]
    %v245 = vld [vmem:[#allocation9 + $0x58] sm:$0xff]
    %v246 = vld [vmem:[#allocation9 + $0x60] sm:$0xff]
    %v247 = vld [vmem:[#allocation9 + $0x68] sm:$0xff]
    %v248 = vld [vmem:[#allocation9 + $0x70] sm:$0xff]
    %v249 = vld [vmem:[#allocation9 + $0x78] sm:$0xff]
    %v250 = vld [vmem:[#allocation9 + $0x80] sm:$0xff]
    %v251 = vld [vmem:[#allocation9 + $0x88] sm:$0xff]
    %v252 = vld [vmem:[#allocation9 + $0x90] sm:$0xff]
    %v253 = vld [vmem:[#allocation9 + $0x98] sm:$0xff]
    %v254 = vld [vmem:[#allocation9 + $0xa0] sm:$0xff]
    %v255 = vld [vmem:[#allocation9 + $0xa8] sm:$0xff]
    %v256 = vld [vmem:[#allocation9 + $0xb0] sm:$0xff]
    %v257 = vld [vmem:[#allocation9 + $0xb8] sm:$0xff]
    %v258 = vld [vmem:[#allocation9 + $0xc0] sm:$0xff]
    %v259 = vld [vmem:[#allocation9 + $0xc8] sm:$0xff]
    %v260 = vld [vmem:[#allocation9 + $0xd0] sm:$0xff]
    %v261 = vld [vmem:[#allocation9 + $0xd8] sm:$0xff]
    %v262 = vld [vmem:[#allocation9 + $0xe0] sm:$0xff]
    %v263 = vld [vmem:[#allocation9 + $0xe8] sm:$0xff]
    %v264 = vld [vmem:[#allocation9 + $0xf0] sm:$0xff]
    %v265 = vld [vmem:[#allocation9 + $0xf8] sm:$0xff]
    %v266 = vld [vmem:[%s9] sm:$0xf]
    %v268 = vperm.slane %v266, 0
    %v269 = vperm.slane %v266, 1
    %v270 = vperm.slane %v266, 2
    %v271 = vperm.slane %v266, 3
    %v308 = vunpack.c.l.b16 %v234
    %v309 = vunpack.c.h.b16 %v234
    %v310 = vunpack.c.l.b16 %v235
    %v311 = vunpack.c.h.b16 %v235
    %v312 = vunpack.c.l.b16 %v236
    %v313 = vunpack.c.h.b16 %v236
    %v314 = vunpack.c.l.b16 %v237
    %v315 = vunpack.c.h.b16 %v237
    %v316 = vunpack.c.l.b16 %v238
    %v317 = vunpack.c.h.b16 %v238
    %v318 = vunpack.c.l.b16 %v239
    %v319 = vunpack.c.h.b16 %v239
    %v320 = vunpack.c.l.b16 %v240
    %v321 = vunpack.c.h.b16 %v240
    %v322 = vunpack.c.l.b16 %v241
    %v323 = vunpack.c.h.b16 %v241
    %v324 = vunpack.c.l.b16 %v242
    %v325 = vunpack.c.h.b16 %v242
    %v326 = vunpack.c.l.b16 %v243
    %v327 = vunpack.c.h.b16 %v243
    %v328 = vunpack.c.l.b16 %v244
    %v329 = vunpack.c.h.b16 %v244
    %v330 = vunpack.c.l.b16 %v245
    %v331 = vunpack.c.h.b16 %v245
    %v332 = vunpack.c.l.b16 %v246
    %v333 = vunpack.c.h.b16 %v246
    %v334 = vunpack.c.l.b16 %v247
    %v335 = vunpack.c.h.b16 %v247
    %v336 = vunpack.c.l.b16 %v248
    %v337 = vunpack.c.h.b16 %v248
    %v338 = vunpack.c.l.b16 %v249
    %v339 = vunpack.c.h.b16 %v249
    %v340 = vunpack.c.l.b16 %v250
    %v341 = vunpack.c.h.b16 %v250
    %v342 = vunpack.c.l.b16 %v251
    %v343 = vunpack.c.h.b16 %v251
    %v344 = vunpack.c.l.b16 %v252
    %v345 = vunpack.c.h.b16 %v252
    %v346 = vunpack.c.l.b16 %v253
    %v347 = vunpack.c.h.b16 %v253
    %v348 = vunpack.c.l.b16 %v254
    %v349 = vunpack.c.h.b16 %v254
    %v350 = vunpack.c.l.b16 %v255
    %v351 = vunpack.c.h.b16 %v255
    %v352 = vunpack.c.l.b16 %v256
    %v353 = vunpack.c.h.b16 %v256
    %v354 = vunpack.c.l.b16 %v257
    %v355 = vunpack.c.h.b16 %v257
    %v356 = vunpack.c.l.b16 %v258
    %v357 = vunpack.c.h.b16 %v258
    %v358 = vunpack.c.l.b16 %v259
    %v359 = vunpack.c.h.b16 %v259
    %v360 = vunpack.c.l.b16 %v260
    %v361 = vunpack.c.h.b16 %v260
    %v362 = vunpack.c.l.b16 %v261
    %v363 = vunpack.c.h.b16 %v261
    %v364 = vunpack.c.l.b16 %v262
    %v365 = vunpack.c.h.b16 %v262
    %v366 = vunpack.c.l.b16 %v263
    %v367 = vunpack.c.h.b16 %v263
    %v368 = vunpack.c.l.b16 %v264
    %v369 = vunpack.c.h.b16 %v264
    %v370 = vunpack.c.l.b16 %v265
    %v371 = vunpack.c.h.b16 %v265
    %v372 = vpack.c.b16 %v312, %v308
    %v373 = vpack.c.b16 %v313, %v309
    %v374 = vpack.c.b16 %v314, %v310
    %v375 = vpack.c.b16 %v315, %v311
    %v376 = vpack.c.b16 %v320, %v316
    %v377 = vpack.c.b16 %v321, %v317
    %v378 = vpack.c.b16 %v322, %v318
    %v379 = vpack.c.b16 %v323, %v319
    %v380 = vpack.c.b16 %v328, %v324
    %v381 = vpack.c.b16 %v329, %v325
    %v382 = vpack.c.b16 %v330, %v326
    %v383 = vpack.c.b16 %v331, %v327
    %v384 = vpack.c.b16 %v336, %v332
    %v385 = vpack.c.b16 %v337, %v333
    %v386 = vpack.c.b16 %v338, %v334
    %v387 = vpack.c.b16 %v339, %v335
    %v388 = vpack.c.b16 %v344, %v340
    %v389 = vpack.c.b16 %v345, %v341
    %v390 = vpack.c.b16 %v346, %v342
    %v391 = vpack.c.b16 %v347, %v343
    %v392 = vpack.c.b16 %v352, %v348
    %v393 = vpack.c.b16 %v353, %v349
    %v394 = vpack.c.b16 %v354, %v350
    %v395 = vpack.c.b16 %v355, %v351
    %v396 = vpack.c.b16 %v360, %v356
    %v397 = vpack.c.b16 %v361, %v357
    %v398 = vpack.c.b16 %v362, %v358
    %v399 = vpack.c.b16 %v363, %v359
    %v400 = vpack.c.b16 %v368, %v364
    %v401 = vpack.c.b16 %v369, %v365
    %v402 = vpack.c.b16 %v370, %v366
    %v403 = vpack.c.b16 %v371, %v367
    %436 = vmatpush.bf16.msra.mxu0 %v400
    %437 = vmatpush.bf16.msra.mxu0 %v396
    %438 = vmatpush.bf16.msra.mxu0 %v392
    %439 = vmatpush.bf16.msra.mxu0 %v388
    %440 = vmatpush.bf16.msra.mxu0 %v384
    %441 = vmatpush.bf16.msra.mxu0 %v380
    %442 = vmatpush.bf16.msra.mxu0 %v376
    %443 = vmatpush.bf16.msra.mxu0 %v372
    %444 = vmatmul.bf16.gmra.mxu0 %v233
    %v445 = vpop.f32.mrf.mxu0
    %v446 = vadd.f32 %v268, %v445
    %v447 = vpop.f32.mrf.mxu0
    %448 = vdwg.mxu0
    %449 = vmatpush.bf16.msra.mxu0 %v401
    %450 = vmatpush.bf16.msra.mxu0 %v397
    %451 = vmatpush.bf16.msra.mxu0 %v393
    %452 = vmatpush.bf16.msra.mxu0 %v389
    %453 = vmatpush.bf16.msra.mxu0 %v385
    %454 = vmatpush.bf16.msra.mxu0 %v381
    %455 = vmatpush.bf16.msra.mxu0 %v377
    %456 = vmatpush.bf16.msra.mxu0 %v373
    %457 = vmatmul.bf16.gmra.mxu0 %v233
    %v458 = vpop.f32.mrf.mxu0
    %v459 = vadd.f32 %v269, %v458
    %v460 = vpop.f32.mrf.mxu0
    %461 = vdwg.mxu0
    %462 = vmatpush.bf16.msra.mxu0 %v402
    %463 = vmatpush.bf16.msra.mxu0 %v398
    %464 = vmatpush.bf16.msra.mxu0 %v394
    %465 = vmatpush.bf16.msra.mxu0 %v390
    %466 = vmatpush.bf16.msra.mxu0 %v386
    %467 = vmatpush.bf16.msra.mxu0 %v382
    %468 = vmatpush.bf16.msra.mxu0 %v378
    %469 = vmatpush.bf16.msra.mxu0 %v374
    %470 = vmatmul.bf16.gmra.mxu0 %v233
    %v471 = vpop.f32.mrf.mxu0
    %v472 = vadd.f32 %v270, %v471
    %v473 = vpop.f32.mrf.mxu0
    %474 = vdwg.mxu0
    %475 = vmatpush.bf16.msra.mxu0 %v403
    %476 = vmatpush.bf16.msra.mxu0 %v399
    %477 = vmatpush.bf16.msra.mxu0 %v395
    %478 = vmatpush.bf16.msra.mxu0 %v391
    %479 = vmatpush.bf16.msra.mxu0 %v387
    %480 = vmatpush.bf16.msra.mxu0 %v383
    %481 = vmatpush.bf16.msra.mxu0 %v379
    %482 = vmatpush.bf16.msra.mxu0 %v375
    %483 = vmatmul.bf16.gmra.mxu0 %v233
    %v484 = vpop.f32.mrf.mxu0
    %v485 = vadd.f32 %v271, %v484
    %v486 = vpop.f32.mrf.mxu0
    %487 = vdwg.mxu0
    %488 = vst [vmem:[%s10] sm:$0xff] %v446
    %489 = vst [vmem:[%s10 + $0x8] sm:$0xff] %v459
    %490 = vst [vmem:[%s10 + $0x10] sm:$0xff] %v472
    %491 = vst [vmem:[%s10 + $0x18] sm:$0xff] %v485
    // Predicated region
    $region54: #{_lambda_.1} parent=1 // pred_check
      _
    $region55: #{_lambda_.1} parent=1 // pred_check_branch
      %493 = sbr.rel (0) target = $region57
    $region56: #{_lambda_.1} parent=1 // pred_region
      _
    $region57: #{_lambda_.1} parent=1 // pred_fallthru
      _
    // Predicated region
    $region58: #{_lambda_.1} parent=1 // pred_check
      _
    $region59: #{_lambda_.1} parent=1 // pred_check_branch
      %495 = sbr.rel (0) target = $region61
    $region60: #{_lambda_.1} parent=1 // pred_region
      _
    $region61: #{_lambda_.1} parent=1 // pred_fallthru
      _
    %496 = vsyncpa [#allocation5], 1
    %497 = vsyncpa [#allocation7], 1
    %498 = vsyncpa [#allocation10], 1

</llo_original>
